<compile_context>
chip_gen: v6e
topology: v6e:2x2x1
jax: 0.10.0
libtpu: 0.0.40
codegen_flags: <defaults>
</compile_context>

<pallas_src>
import jax
import jax.numpy as jnp
import numpy as np
from jax.experimental import pallas as pl
from jax.experimental.pallas import tpu as pltpu

EPS = 1e-06

# ----- small config ---------------------------------------------------------
B = 2                 # batch
L = 8                 # sequence length
HIDDEN = 32           # hidden_dim == word_embedding_dim (Toy network)
COND_DIM = 16         # condition_dim
NUM_CLASSES = 24      # vocab size
BETA_MIN = 0.1        # VPSDE beta_min
BETA_MAX = 20.0       # VPSDE beta_max
N_TOK = B * L


# ----- Pallas kernel --------------------------------------------------------
def _fused_forward_kernel(repr_ref, eps_ref, mask_ref, logits_ref, true_ref,
                          cond_ref, t_ref,
                          w_cond_ref, b_cond_ref, w_score_ref, b_score_ref,
                          out_ref):
    repr3 = repr_ref[...]          # (B, L, H) gathered word embeddings
    eps3 = eps_ref[...]            # (B, L, H) gaussian noise
    mask3 = mask_ref[...]          # (B, L, 1) attention mask
    logits3 = logits_ref[...]      # (B, L, C) decoder logits (gathered rows of w_emb@w_dec + b_dec)
    true3 = true_ref[...]          # (B, L, 1) logit of the true class

    # condition = condition_proj_layer(condition)   -- once per batch row
    cond_proj = jnp.dot(cond_ref[...], w_cond_ref[...],
                        preferred_element_type=jnp.float32) + b_cond_ref[...]   # (B, H)

    # VPSDE.marginal_prob, once per batch:
    #   lmc = -0.25 t^2 (beta_max - beta_min) - 0.5 t beta_min
    #   mean = exp(lmc) * x ; std = sqrt(1 - exp(2 lmc))  (exp(2 lmc) = e*e)
    t = t_ref[...]                                                      # (B, 1)
    lmc = -0.25 * t * t * (BETA_MAX - BETA_MIN) - 0.5 * t * BETA_MIN    # (B, 1)
    e = jnp.exp(lmc)                                                    # (B, 1)
    std = jnp.sqrt(1.0 - e * e)                                         # (B, 1)

    x_noise = e[:, :, None] * repr3 + std[:, :, None] * eps3            # (B, L, H)

    # score network (Toy): condition-added single linear layer.
    # TODO(synk): exact ToyScoreNetwork definition is not in the provided
    # snippet; modeled as (x + cond_proj) @ W_score + b_score.
    score_in = x_noise + cond_proj[:, None, :]                          # (B, L, H)
    net_out2 = jnp.dot(score_in.reshape(N_TOK, HIDDEN), w_score_ref[...],
                       preferred_element_type=jnp.float32) + b_score_ref[...]   # (N, H)
    net_out = net_out2.reshape(B, L, HIDDEN)

    # get_score_fn (VPSDE, continuous): score = -net_out / std, and the loss
    # uses score*std + eps, which cancels exactly to (eps - net_out).
    diff = eps3 - net_out
    total_sde = diff * diff                                             # (B, L, H)
    sde_row = jnp.sum(total_sde, axis=-1, keepdims=True)                # (B, L, 1)

    # shared (exact) reciprocal of the mask sum; clamp guards the degenerate
    # all-zero-mask case (PyTorch would give inf/NaN there).
    mask_sum = jnp.maximum(jnp.sum(mask3), 1.0)
    inv_mask = 1.0 / mask_sum

    sde_loss = (jnp.sum(sde_row) * (1.0 / float(N_TOK * HIDDEN))
                + jnp.sum(sde_row * mask3) * inv_mask)

    # decoding loss: CE(decoder(repr), ids), reduction='none', mean + masked mean
    mx = jnp.max(logits3, axis=-1, keepdims=True)
    lse = mx + jnp.log(jnp.sum(jnp.exp(logits3 - mx), axis=-1, keepdims=True))
    ce = lse - true3                                                    # (B, L, 1)
    dec_loss = (jnp.sum(ce) * (1.0 / float(N_TOK))
                + jnp.sum(ce * mask3) * inv_mask)

    # single lane-dense output block: lane 0 = SDE loss, lane 1 = decoding loss
    lane = jax.lax.broadcasted_iota(jnp.int32, (1, 128), 1)
    out_ref[...] = jnp.where(lane == 0, sde_loss,
                             jnp.where(lane == 1, dec_loss, 0.0))


def _run_kernel(repr3, eps3, mask3, logits3, true3, cond, t, params):
    vmem = pl.BlockSpec(memory_space=pltpu.MemorySpace.VMEM)
    out = pl.pallas_call(
        _fused_forward_kernel,
        out_shape=jax.ShapeDtypeStruct((1, 128), jnp.float32),
        in_specs=[vmem] * 11,
        out_specs=vmem,
    )(repr3, eps3, mask3, logits3, true3, cond, t,
      params["w_cond"], params["b_cond"], params["w_score"], params["b_score"])
    return out[0, 0], out[0, 1]


# ----- wrapper: glue (RNG, gathers, weight fold) + kernel call ---------------
@jax.jit
def gaussian_sde_decoder_forward(protein_seq_input_ids, protein_seq_attention_mask,
                                 condition, params, key):
    k_t, k_eps = jax.random.split(key)
    # timesteps = rand(B) * (1 - EPS) + EPS
    timesteps = jax.random.uniform(k_t, (B,), dtype=jnp.float32) * (1.0 - EPS) + EPS
    # epsilon = randn_like(protein_seq_repr)
    eps = jax.random.normal(k_eps, (B, L, HIDDEN), dtype=jnp.float32)

    ids = protein_seq_input_ids
    # embedding_layer(one_hot(ids)) == row gather of w_emb (no one-hot matmul)
    repr3 = jnp.take(params["w_emb"], ids, axis=0)                       # (B, L, H)

    # decoder logits folded through the embedding:
    #   decoder(embedding(onehot)) == onehot @ (w_emb @ w_dec) + b_dec
    w_ed = params["w_emb"] @ params["w_dec"]                             # (C, C)
    logits3 = jnp.take(w_ed, ids, axis=0) + params["b_dec"][0]           # (B, L, C)
    true3 = jnp.take_along_axis(logits3, ids[..., None], axis=-1)        # (B, L, 1)

    mask3 = protein_seq_attention_mask.astype(jnp.float32)[..., None]    # (B, L, 1)
    t2 = timesteps.reshape(B, 1)
    cond2 = condition.astype(jnp.float32)                                # (B, Dc)

    return _run_kernel(repr3, eps, mask3, logits3, true3, cond2, t2, params)


# ----- plain-JAX reference (faithful to the PyTorch module) ------------------
def reference_forward(protein_seq_input_ids, protein_seq_attention_mask,
                      condition, params, key):
    k_t, k_eps = jax.random.split(key)
    timesteps = jax.random.uniform(k_t, (B,), dtype=jnp.float32) * (1.0 - EPS) + EPS
    eps = jax.random.normal(k_eps, (B, L, HIDDEN), dtype=jnp.float32)

    cond_proj = condition.astype(jnp.float32) @ params["w_cond"] + params["b_cond"][0]
    onehot = jax.nn.one_hot(protein_seq_input_ids, NUM_CLASSES, dtype=jnp.float32)
    repr_ = onehot @ params["w_emb"]                              # (B, L, H)

    lmc = -0.25 * timesteps ** 2 * (BETA_MAX - BETA_MIN) - 0.5 * timesteps * BETA_MIN
    std = jnp.sqrt(1.0 - jnp.exp(2.0 * lmc))                      # (B,)
    x_noise = jnp.exp(lmc)[:, None, None] * repr_ + std[:, None, None] * eps

    net_out = (x_noise + cond_proj[:, None, :]) @ params["w_score"] + params["b_score"][0]
    score = -net_out / std[:, None, None]

    mask = protein_seq_attention_mask.astype(jnp.float32)
    total_sde = jnp.square(score * std[:, None, None] + eps)
    sde_loss = jnp.mean(total_sde) + jnp.sum(total_sde * mask[:, :, None]) / jnp.sum(mask)

    logits = repr_ @ params["w_dec"] + params["b_dec"][0]
    flat_logits = logits.reshape(-1, NUM_CLASSES)
    flat_ids = protein_seq_input_ids.reshape(-1)
    flat_mask = mask.reshape(-1)
    ce = jax.nn.logsumexp(flat_logits, axis=-1) - jnp.take_along_axis(
        flat_logits, flat_ids[:, None], axis=-1)[:, 0]
    dec_loss = jnp.mean(ce) + jnp.sum(ce * flat_mask) / jnp.sum(flat_mask)
    return sde_loss, dec_loss


# ----- main ------------------------------------------------------------------
if __name__ == "__main__":
    root = jax.random.PRNGKey(0)
    k_ids, k_mask, k_cond, k_fwd, kp1, kp2, kp3, kp4, kp5, kp6, kp7 = \
        jax.random.split(root, 11)

    protein_seq_input_ids = jax.random.randint(k_ids, (B, L), 0, NUM_CLASSES,
                                               dtype=jnp.int32)
    protein_seq_attention_mask = (jax.random.uniform(k_mask, (B, L)) > 0.2
                                  ).astype(jnp.float32)
    condition = jax.random.normal(k_cond, (B, COND_DIM), dtype=jnp.float32)

    # deterministic synthetic parameters (shapes from module __init__)
    params = {
        "w_emb":   0.05 * jax.random.normal(kp1, (NUM_CLASSES, HIDDEN), jnp.float32),
        "w_cond":  0.05 * jax.random.normal(kp2, (COND_DIM, HIDDEN), jnp.float32),
        "b_cond":  0.05 * jax.random.normal(kp3, (1, HIDDEN), jnp.float32),
        "w_score": 0.05 * jax.random.normal(kp4, (HIDDEN, HIDDEN), jnp.float32),
        "b_score": 0.05 * jax.random.normal(kp5, (1, HIDDEN), jnp.float32),
        "w_dec":   0.05 * jax.random.normal(kp6, (HIDDEN, NUM_CLASSES), jnp.float32),
        "b_dec":   0.05 * jax.random.normal(kp7, (1, NUM_CLASSES), jnp.float32),
    }

    sde_loss, dec_loss = gaussian_sde_decoder_forward(
        protein_seq_input_ids, protein_seq_attention_mask, condition, params, k_fwd)
    jax.block_until_ready((sde_loss, dec_loss))

    sde_ref, dec_ref = reference_forward(
        protein_seq_input_ids, protein_seq_attention_mask, condition, params, k_fwd)
    np.testing.assert_allclose(np.asarray(sde_loss), np.asarray(sde_ref),
                               rtol=1e-4, atol=1e-5)
    np.testing.assert_allclose(np.asarray(dec_loss), np.asarray(dec_ref),
                               rtol=1e-4, atol=1e-5)

    print("KERNEL_OK")
</pallas_src>

<mosaic_0001>
module attributes {stable_mosaic.version = 11 : i64} {
  func.func @_fused_forward_kernel(%arg0: memref<2x8x32xf32, #tpu.memory_space<vmem>>, %arg1: memref<2x8x32xf32, #tpu.memory_space<vmem>>, %arg2: memref<2x8x1xf32, #tpu.memory_space<vmem>>, %arg3: memref<2x8x24xf32, #tpu.memory_space<vmem>>, %arg4: memref<2x8x1xf32, #tpu.memory_space<vmem>>, %arg5: memref<2x16xf32, #tpu.memory_space<vmem>>, %arg6: memref<2x1xf32, #tpu.memory_space<vmem>>, %arg7: memref<16x32xf32, #tpu.memory_space<vmem>>, %arg8: memref<1x32xf32, #tpu.memory_space<vmem>>, %arg9: memref<32x32xf32, #tpu.memory_space<vmem>>, %arg10: memref<1x32xf32, #tpu.memory_space<vmem>>, %arg11: memref<1x128xf32, #tpu.memory_space<vmem>>) attributes {dimension_semantics = [], scalar_prefetch = 0 : i64, scratch_operands = 0 : i64, tpu.core_type = #tpu.core_type<tc>} {
    %c0 = arith.constant 0 : index
    %c0_0 = arith.constant 0 : index
    %c0_1 = arith.constant 0 : index
    %0 = vector.load %arg0[%c0, %c0_0, %c0_1] : memref<2x8x32xf32, #tpu.memory_space<vmem>>, vector<2x8x32xf32>
    %c0_2 = arith.constant 0 : index
    %c0_3 = arith.constant 0 : index
    %c0_4 = arith.constant 0 : index
    %1 = vector.load %arg1[%c0_2, %c0_3, %c0_4] : memref<2x8x32xf32, #tpu.memory_space<vmem>>, vector<2x8x32xf32>
    %c0_5 = arith.constant 0 : index
    %c0_6 = arith.constant 0 : index
    %c0_7 = arith.constant 0 : index
    %2 = vector.load %arg2[%c0_5, %c0_6, %c0_7] : memref<2x8x1xf32, #tpu.memory_space<vmem>>, vector<2x8x1xf32>
    %c0_8 = arith.constant 0 : index
    %c0_9 = arith.constant 0 : index
    %c0_10 = arith.constant 0 : index
    %3 = vector.load %arg3[%c0_8, %c0_9, %c0_10] : memref<2x8x24xf32, #tpu.memory_space<vmem>>, vector<2x8x24xf32>
    %c0_11 = arith.constant 0 : index
    %c0_12 = arith.constant 0 : index
    %c0_13 = arith.constant 0 : index
    %4 = vector.load %arg4[%c0_11, %c0_12, %c0_13] : memref<2x8x1xf32, #tpu.memory_space<vmem>>, vector<2x8x1xf32>
    %c0_14 = arith.constant 0 : index
    %c0_15 = arith.constant 0 : index
    %5 = vector.load %arg5[%c0_14, %c0_15] : memref<2x16xf32, #tpu.memory_space<vmem>>, vector<2x16xf32>
    %c0_16 = arith.constant 0 : index
    %c0_17 = arith.constant 0 : index
    %6 = vector.load %arg7[%c0_16, %c0_17] : memref<16x32xf32, #tpu.memory_space<vmem>>, vector<16x32xf32>
    %cst = arith.constant dense<0.000000e+00> : vector<2x32xf32>
    %7 = tpu.matmul %5, %6, %cst {dimension_numbers = #tpu.dot_dimension_numbers<[1], [0], [0], [1], [0, 0, 1, 1], [], []>} : vector<2x16xf32>, vector<16x32xf32>, vector<2x32xf32> -> vector<2x32xf32>
    %c0_18 = arith.constant 0 : index
    %c0_19 = arith.constant 0 : index
    %8 = vector.load %arg8[%c0_18, %c0_19] : memref<1x32xf32, #tpu.memory_space<vmem>>, vector<1x32xf32>
    %9 = vector.broadcast %8 : vector<1x32xf32> to vector<2x32xf32>
    %10 = arith.addf %7, %9 : vector<2x32xf32>
    %c0_20 = arith.constant 0 : index
    %c0_21 = arith.constant 0 : index
    %11 = vector.load %arg6[%c0_20, %c0_21] : memref<2x1xf32, #tpu.memory_space<vmem>>, vector<2x1xf32>
    %cst_22 = arith.constant -2.500000e-01 : f32
    %12 = vector.broadcast %cst_22 : f32 to vector<2x1xf32>
    %13 = arith.mulf %12, %11 : vector<2x1xf32>
    %14 = arith.mulf %13, %11 : vector<2x1xf32>
    %cst_23 = arith.constant 1.990000e+01 : f32
    %15 = vector.broadcast %cst_23 : f32 to vector<2x1xf32>
    %16 = arith.mulf %14, %15 : vector<2x1xf32>
    %cst_24 = arith.constant 5.000000e-01 : f32
    %17 = vector.broadcast %cst_24 : f32 to vector<2x1xf32>
    %18 = arith.mulf %17, %11 : vector<2x1xf32>
    %cst_25 = arith.constant 1.000000e-01 : f32
    %19 = vector.broadcast %cst_25 : f32 to vector<2x1xf32>
    %20 = arith.mulf %18, %19 : vector<2x1xf32>
    %21 = arith.subf %16, %20 : vector<2x1xf32>
    %22 = math.exp %21 : vector<2x1xf32>
    %23 = arith.mulf %22, %22 : vector<2x1xf32>
    %cst_26 = arith.constant 1.000000e+00 : f32
    %24 = vector.broadcast %cst_26 : f32 to vector<2x1xf32>
    %25 = arith.subf %24, %23 : vector<2x1xf32>
    %26 = math.sqrt %25 : vector<2x1xf32>
    %27 = vector.shape_cast %22 : vector<2x1xf32> to vector<2x1x1xf32>
    %28 = vector.broadcast %27 : vector<2x1x1xf32> to vector<2x8x32xf32>
    %29 = arith.mulf %28, %0 : vector<2x8x32xf32>
    %30 = vector.shape_cast %26 : vector<2x1xf32> to vector<2x1x1xf32>
    %31 = vector.broadcast %30 : vector<2x1x1xf32> to vector<2x8x32xf32>
    %32 = arith.mulf %31, %1 : vector<2x8x32xf32>
    %33 = arith.addf %29, %32 : vector<2x8x32xf32>
    %34 = vector.shape_cast %10 : vector<2x32xf32> to vector<2x1x32xf32>
    %35 = vector.broadcast %34 : vector<2x1x32xf32> to vector<2x8x32xf32>
    %36 = arith.addf %33, %35 : vector<2x8x32xf32>
    %37 = vector.shape_cast %36 : vector<2x8x32xf32> to vector<16x32xf32>
    %c0_27 = arith.constant 0 : index
    %c0_28 = arith.constant 0 : index
    %38 = vector.load %arg9[%c0_27, %c0_28] : memref<32x32xf32, #tpu.memory_space<vmem>>, vector<32x32xf32>
    %cst_29 = arith.constant dense<0.000000e+00> : vector<16x32xf32>
    %39 = tpu.matmul %37, %38, %cst_29 {dimension_numbers = #tpu.dot_dimension_numbers<[1], [0], [0], [1], [0, 0, 1, 1], [], []>} : vector<16x32xf32>, vector<32x32xf32>, vector<16x32xf32> -> vector<16x32xf32>
    %c0_30 = arith.constant 0 : index
    %c0_31 = arith.constant 0 : index
    %40 = vector.load %arg10[%c0_30, %c0_31] : memref<1x32xf32, #tpu.memory_space<vmem>>, vector<1x32xf32>
    %41 = vector.broadcast %40 : vector<1x32xf32> to vector<16x32xf32>
    %42 = arith.addf %39, %41 : vector<16x32xf32>
    %43 = vector.shape_cast %42 : vector<16x32xf32> to vector<2x8x32xf32>
    %44 = arith.subf %1, %43 : vector<2x8x32xf32>
    %45 = arith.mulf %44, %44 : vector<2x8x32xf32>
    %cst_32 = arith.constant dense<0.000000e+00> : vector<2x8xf32>
    %46 = vector.multi_reduction <add>, %45, %cst_32 [2] : vector<2x8x32xf32> to vector<2x8xf32>
    %47 = vector.shape_cast %46 : vector<2x8xf32> to vector<2x8x1xf32>
    %48 = vector.shape_cast %2 : vector<2x8x1xf32> to vector<1x2x8x1xf32>
    %cst_33 = arith.constant dense<0.000000e+00> : vector<1xf32>
    %49 = vector.multi_reduction <add>, %48, %cst_33 [1, 2, 3] : vector<1x2x8x1xf32> to vector<1xf32>
    %50 = vector.shape_cast %49 : vector<1xf32> to vector<1x1x1x1xf32>
    %51 = vector.extract %50[0, 0, 0, 0] : f32 from vector<1x1x1x1xf32>
    %cst_34 = arith.constant 1.000000e+00 : f32
    %52 = arith.maximumf %51, %cst_34 : f32
    %cst_35 = arith.constant 1.000000e+00 : f32
    %53 = arith.divf %cst_35, %52 : f32
    %54 = vector.shape_cast %47 : vector<2x8x1xf32> to vector<1x2x8x1xf32>
    %cst_36 = arith.constant dense<0.000000e+00> : vector<1xf32>
    %55 = vector.multi_reduction <add>, %54, %cst_36 [1, 2, 3] : vector<1x2x8x1xf32> to vector<1xf32>
    %56 = vector.shape_cast %55 : vector<1xf32> to vector<1x1x1x1xf32>
    %57 = vector.extract %56[0, 0, 0, 0] : f32 from vector<1x1x1x1xf32>
    %cst_37 = arith.constant 0.001953125 : f32
    %58 = arith.mulf %57, %cst_37 : f32
    %59 = arith.mulf %47, %2 : vector<2x8x1xf32>
    %60 = vector.shape_cast %59 : vector<2x8x1xf32> to vector<1x2x8x1xf32>
    %cst_38 = arith.constant dense<0.000000e+00> : vector<1xf32>
    %61 = vector.multi_reduction <add>, %60, %cst_38 [1, 2, 3] : vector<1x2x8x1xf32> to vector<1xf32>
    %62 = vector.shape_cast %61 : vector<1xf32> to vector<1x1x1x1xf32>
    %63 = vector.extract %62[0, 0, 0, 0] : f32 from vector<1x1x1x1xf32>
    %64 = arith.mulf %63, %53 : f32
    %65 = arith.addf %58, %64 : f32
    %cst_39 = arith.constant dense<0xFF800000> : vector<2x8xf32>
    %66 = vector.multi_reduction <maximumf>, %3, %cst_39 [2] : vector<2x8x24xf32> to vector<2x8xf32>
    %67 = vector.shape_cast %66 : vector<2x8xf32> to vector<2x8x1xf32>
    %68 = vector.broadcast %67 : vector<2x8x1xf32> to vector<2x8x24xf32>
    %69 = arith.subf %3, %68 : vector<2x8x24xf32>
    %70 = math.exp %69 : vector<2x8x24xf32>
    %cst_40 = arith.constant dense<0.000000e+00> : vector<2x8xf32>
    %71 = vector.multi_reduction <add>, %70, %cst_40 [2] : vector<2x8x24xf32> to vector<2x8xf32>
    %72 = vector.shape_cast %71 : vector<2x8xf32> to vector<2x8x1xf32>
    %73 = math.log %72 : vector<2x8x1xf32>
    %74 = arith.addf %67, %73 : vector<2x8x1xf32>
    %75 = arith.subf %74, %4 : vector<2x8x1xf32>
    %76 = vector.shape_cast %75 : vector<2x8x1xf32> to vector<1x2x8x1xf32>
    %cst_41 = arith.constant dense<0.000000e+00> : vector<1xf32>
    %77 = vector.multi_reduction <add>, %76, %cst_41 [1, 2, 3] : vector<1x2x8x1xf32> to vector<1xf32>
    %78 = vector.shape_cast %77 : vector<1xf32> to vector<1x1x1x1xf32>
    %79 = vector.extract %78[0, 0, 0, 0] : f32 from vector<1x1x1x1xf32>
    %cst_42 = arith.constant 6.250000e-02 : f32
    %80 = arith.mulf %79, %cst_42 : f32
    %81 = arith.mulf %75, %2 : vector<2x8x1xf32>
    %82 = vector.shape_cast %81 : vector<2x8x1xf32> to vector<1x2x8x1xf32>
    %cst_43 = arith.constant dense<0.000000e+00> : vector<1xf32>
    %83 = vector.multi_reduction <add>, %82, %cst_43 [1, 2, 3] : vector<1x2x8x1xf32> to vector<1xf32>
    %84 = vector.shape_cast %83 : vector<1xf32> to vector<1x1x1x1xf32>
    %85 = vector.extract %84[0, 0, 0, 0] : f32 from vector<1x1x1x1xf32>
    %86 = arith.mulf %85, %53 : f32
    %87 = arith.addf %80, %86 : f32
    %88 = tpu.iota {dimensions = array<i32: 1>} : vector<1x128xi32>
    %c0_i32 = arith.constant 0 : i32
    %89 = vector.broadcast %c0_i32 : i32 to vector<1x128xi32>
    %90 = arith.cmpi eq, %88, %89 : vector<1x128xi32>
    %c1_i32 = arith.constant 1 : i32
    %91 = vector.broadcast %c1_i32 : i32 to vector<1x128xi32>
    %92 = arith.cmpi eq, %88, %91 : vector<1x128xi32>
    %cst_44 = arith.constant 0.000000e+00 : f32
    %93 = vector.broadcast %87 : f32 to vector<1x128xf32>
    %94 = vector.broadcast %cst_44 : f32 to vector<1x128xf32>
    %95 = arith.select %92, %93, %94 : vector<1x128xi1>, vector<1x128xf32>
    %96 = vector.broadcast %65 : f32 to vector<1x128xf32>
    %97 = arith.select %90, %96, %95 : vector<1x128xi1>, vector<1x128xf32>
    %c0_45 = arith.constant 0 : index
    %c0_46 = arith.constant 0 : index
    %98 = vector.load %arg11[%c0_45, %c0_46] : memref<1x128xf32, #tpu.memory_space<vmem>>, vector<1x128xf32>
    tpu.vector_store %arg11[%c0_45, %c0_46], %97 {strides = array<i32>} : memref<1x128xf32, #tpu.memory_space<vmem>>, vector<1x128xf32>,
    return
  }
}

</mosaic_0001>

<llo_original>
// kernel: gaussian_sde_decoder_forward.1
$region0: #{gaussian_sde_decoder_forward.1}
  #allocation0 [shape = 'u32[]', space=smem, size = 0x4, offset = 0x4, fixed_abs, tag = 'smem constant byte address 0x4 - core index']
  #allocation1 [shape = 'u32[144,128]{1,0:T(1,128)}', space=vmem, size = 0x12000, scoped, tag = 'internal scratch']
  %s0 = inlined_call_operand.vmem [shape: f32[2,8,32], index: 0, kind: input, shape index: {}]
  %s1 = inlined_call_operand.vmem [shape: f32[2,8,32], index: 1, kind: input, shape index: {}]
  %s2 = inlined_call_operand.vmem [shape: f32[2,8,1], index: 2, kind: input, shape index: {}]
  %s3 = inlined_call_operand.vmem [shape: f32[2,8,24], index: 3, kind: input, shape index: {}]
  %s4 = inlined_call_operand.vmem [shape: f32[2,8,1], index: 4, kind: input, shape index: {}]
  %s5 = inlined_call_operand.vmem [shape: f32[2,16], index: 5, kind: input, shape index: {}]
  %s6 = inlined_call_operand.vmem [shape: f32[2,1], index: 6, kind: input, shape index: {}]
  %s7 = inlined_call_operand.vmem [shape: f32[16,32], index: 7, kind: input, shape index: {}]
  %s8 = inlined_call_operand.vmem [shape: f32[1,32], index: 8, kind: input, shape index: {}]
  %s9 = inlined_call_operand.vmem [shape: f32[32,32], index: 9, kind: input, shape index: {}]
  %s10 = inlined_call_operand.vmem [shape: f32[1,32], index: 10, kind: input, shape index: {}]
  %s11 = inlined_call_operand.vmem [shape: f32[1,128], index: 11, kind: output, shape index: {}]
  %s12 = sld [smem:[#allocation0]]
  $region54: #{gaussian_sde_decoder_forward.1} parent=0
    _
  %s14 = ssub.s32 1, %s12
  %s15 = scalar_select 0, %s14, %s12
  // Predicated region
  $region2: #{gaussian_sde_decoder_forward.1} parent=0 // pred_check
    _
  $region3: #{gaussian_sde_decoder_forward.1} parent=0 // pred_check_branch
    %17 = sbr.rel (0) target = $region5
  $region4: #{gaussian_sde_decoder_forward.1} parent=0 // pred_region
    _
  $region5: #{gaussian_sde_decoder_forward.1} parent=0 // pred_fallthru
    _
  // Predicated region
  $region6: #{gaussian_sde_decoder_forward.1} parent=0 // pred_check
    _
  $region7: #{gaussian_sde_decoder_forward.1} parent=0 // pred_check_branch
    %19 = sbr.rel (0) target = $region9
  $region8: #{gaussian_sde_decoder_forward.1} parent=0 // pred_region
    _
  $region9: #{gaussian_sde_decoder_forward.1} parent=0 // pred_fallthru
    _
  // Predicated region
  $region10: #{gaussian_sde_decoder_forward.1} parent=0 // pred_check
    _
  $region11: #{gaussian_sde_decoder_forward.1} parent=0 // pred_check_branch
    %21 = sbr.rel (0) target = $region13
  $region12: #{gaussian_sde_decoder_forward.1} parent=0 // pred_region
    _
  $region13: #{gaussian_sde_decoder_forward.1} parent=0 // pred_fallthru
    _
  // Predicated region
  $region14: #{gaussian_sde_decoder_forward.1} parent=0 // pred_check
    _
  $region15: #{gaussian_sde_decoder_forward.1} parent=0 // pred_check_branch
    %23 = sbr.rel (0) target = $region17
  $region16: #{gaussian_sde_decoder_forward.1} parent=0 // pred_region
    _
  $region17: #{gaussian_sde_decoder_forward.1} parent=0 // pred_fallthru
    _
  // Predicated region
  $region18: #{gaussian_sde_decoder_forward.1} parent=0 // pred_check
    _
  $region19: #{gaussian_sde_decoder_forward.1} parent=0 // pred_check_branch
    %25 = sbr.rel (0) target = $region21
  $region20: #{gaussian_sde_decoder_forward.1} parent=0 // pred_region
    _
  $region21: #{gaussian_sde_decoder_forward.1} parent=0 // pred_fallthru
    _
  // Predicated region
  $region22: #{gaussian_sde_decoder_forward.1} parent=0 // pred_check
    _
  $region23: #{gaussian_sde_decoder_forward.1} parent=0 // pred_check_branch
    %27 = sbr.rel (0) target = $region25
  $region24: #{gaussian_sde_decoder_forward.1} parent=0 // pred_region
    _
  $region25: #{gaussian_sde_decoder_forward.1} parent=0 // pred_fallthru
    _
  // Predicated region
  $region26: #{gaussian_sde_decoder_forward.1} parent=0 // pred_check
    _
  $region27: #{gaussian_sde_decoder_forward.1} parent=0 // pred_check_branch
    %29 = sbr.rel (0) target = $region29
  $region28: #{gaussian_sde_decoder_forward.1} parent=0 // pred_region
    _
  $region29: #{gaussian_sde_decoder_forward.1} parent=0 // pred_fallthru
    _
  // Predicated region
  $region30: #{gaussian_sde_decoder_forward.1} parent=0 // pred_check
    _
  $region31: #{gaussian_sde_decoder_forward.1} parent=0 // pred_check_branch
    %31 = sbr.rel (0) target = $region33
  $region32: #{gaussian_sde_decoder_forward.1} parent=0 // pred_region
    _
  $region33: #{gaussian_sde_decoder_forward.1} parent=0 // pred_fallthru
    _
  // Predicated region
  $region34: #{gaussian_sde_decoder_forward.1} parent=0 // pred_check
    _
  $region35: #{gaussian_sde_decoder_forward.1} parent=0 // pred_check_branch
    %33 = sbr.rel (0) target = $region37
  $region36: #{gaussian_sde_decoder_forward.1} parent=0 // pred_region
    _
  $region37: #{gaussian_sde_decoder_forward.1} parent=0 // pred_fallthru
    _
  // Predicated region
  $region38: #{gaussian_sde_decoder_forward.1} parent=0 // pred_check
    _
  $region39: #{gaussian_sde_decoder_forward.1} parent=0 // pred_check_branch
    %35 = sbr.rel (0) target = $region41
  $region40: #{gaussian_sde_decoder_forward.1} parent=0 // pred_region
    _
  $region41: #{gaussian_sde_decoder_forward.1} parent=0 // pred_fallthru
    _
  // Predicated region
  $region42: #{gaussian_sde_decoder_forward.1} parent=0 // pred_check
    _
  $region43: #{gaussian_sde_decoder_forward.1} parent=0 // pred_check_branch
    %37 = sbr.rel (0) target = $region45
  $region44: #{gaussian_sde_decoder_forward.1} parent=0 // pred_region
    _
  $region45: #{gaussian_sde_decoder_forward.1} parent=0 // pred_fallthru
    _
  %v38 = vld [vmem:[%s0] sm:$0xff]
  %v39 = vld [vmem:[%s0 + $0x8] sm:$0xff]
  %v40 = vld [vmem:[%s1] sm:$0xff]
  %v41 = vld [vmem:[%s1 + $0x8] sm:$0xff]
  %v42 = vld [vmem:[%s2] sm:$0xff]
  %v43 = vld [vmem:[%s2 + $0x8] sm:$0xff]
  %v44 = vld [vmem:[%s3] sm:$0xff]
  %v45 = vld [vmem:[%s3 + $0x8] sm:$0xff]
  %v46 = vld [vmem:[%s4] sm:$0xff]
  %v47 = vld [vmem:[%s4 + $0x8] sm:$0xff]
  %v48 = vld [vmem:[%s5] sm:$0x3]
  %v49 = vld [vmem:[%s7] sm:$0xff]
  %v50 = vld [vmem:[%s7 + $0x8] sm:$0xff]
  %v51 = vld [vmem:[%s8] sm:$0x1]
  %v53 = vlaneseq
  %v54 = vshrl.u32 %v53, 7
  %v55 = vsub.s32 0, %v54
  %v56 = vrot.slane %v51, %v55
  %vm58 = vcmask 130048
  %v60 = vsel %vm58, %v48, 0
  %62 = vmatprep.subr.mxu0 0.0
  %63 = vmatpush1.msra.mxu0 0.0
  %64 = vmatprep.subr.mxu0 0.0
  %65 = vmatpush1.msra.mxu0 0.0
  %66 = vmatprep.subr.mxu0 0.0
  %67 = vmatpush1.msra.mxu0 0.0
  %68 = vmatprep.subr.mxu0 0.0
  %69 = vmatpush1.msra.mxu0 0.0
  %70 = vmatprep.subr.mxu0 0.0
  %71 = vmatpush1.msra.mxu0 0.0
  %72 = vmatprep.subr.mxu0 0.0
  %73 = vmatpush1.msra.mxu0 0.0
  %74 = vmatprep.subr.mxu0 0.0
  %75 = vmatpush1.msra.mxu0 0.0
  %76 = vmatprep.subr.mxu0 0.0
  %77 = vmatpush1.msra.mxu0 0.0
  %78 = vmatprep.subr.mxu0 0.0
  %79 = vmatpush1.msra.mxu0 0.0
  %80 = vmatprep.subr.mxu0 0.0
  %81 = vmatpush1.msra.mxu0 0.0
  %82 = vmatprep.subr.mxu0 0.0
  %83 = vmatpush1.msra.mxu0 0.0
  %84 = vmatprep.subr.mxu0 0.0
  %85 = vmatpush1.msra.mxu0 0.0
  %86 = vmatprep.subr.mxu0 0.0
  %87 = vmatpush1.msra.mxu0 0.0
  %88 = vmatprep.subr.mxu0 0.0
  %89 = vmatpush1.msra.mxu0 0.0
  %90 = vmatprep.subr.mxu0 0.0
  %91 = vmatpush1.msra.mxu0 %v50
  %92 = vmatprep.subr.mxu0 0.0
  %93 = vmatpush1.msra.mxu0 %v49
  %94 = vmatprep.subr.mxu0 0.0
  %95 = vmatpush2.msra.mxu0 0.0
  %96 = vmatprep.subr.mxu0 0.0
  %97 = vmatpush2.msra.mxu0 0.0
  %98 = vmatprep.subr.mxu0 0.0
  %99 = vmatpush2.msra.mxu0 0.0
  %100 = vmatprep.subr.mxu0 0.0
  %101 = vmatpush2.msra.mxu0 0.0
  %102 = vmatprep.subr.mxu0 0.0
  %103 = vmatpush2.msra.mxu0 0.0
  %104 = vmatprep.subr.mxu0 0.0
  %105 = vmatpush2.msra.mxu0 0.0
  %106 = vmatprep.subr.mxu0 0.0
  %107 = vmatpush2.msra.mxu0 0.0
  %108 = vmatprep.subr.mxu0 0.0
  %109 = vmatpush2.msra.mxu0 0.0
  %110 = vmatprep.subr.mxu0 0.0
  %111 = vmatpush2.msra.mxu0 0.0
  %112 = vmatprep.subr.mxu0 0.0
  %113 = vmatpush2.msra.mxu0 0.0
  %114 = vmatprep.subr.mxu0 0.0
  %115 = vmatpush2.msra.mxu0 0.0
  %116 = vmatprep.subr.mxu0 0.0
  %117 = vmatpush2.msra.mxu0 0.0
  %118 = vmatprep.subr.mxu0 0.0
  %119 = vmatpush2.msra.mxu0 0.0
  %120 = vmatprep.subr.mxu0 0.0
  %121 = vmatpush2.msra.mxu0 0.0
  %122 = vmatprep.subr.mxu0 0.0
  %123 = vmatpush2.msra.mxu0 0.0
  %124 = vmatprep.subr.mxu0 0.0
  %125 = vmatpush2.msra.mxu0 0.0
  %126 = vmatprep.mubr.f32.mxu0 0.0
  %127 = vmatmul.mubr.f32.gmra.mxu0 %v60
  %v128 = vpop.f32.mrf.mxu0
  %v129 = vadd.f32 %v56, %v128
  %v130 = vpop.f32.mrf.mxu0
  %131 = vdwg.mxu0
  %v132 = vld [vmem:[%s6] sm:$0x3]
  %v133 = vmul.f32 %v132, -0.25
  %v134 = vmul.f32 %v133, %v132
  %v135 = vmul.f32 %v134, 19.9
  %v136 = vmul.f32 %v132, 0.5
  %v137 = vmul.f32 %v136, 0.1
  %v138 = vsub.f32 %v135, %v137
  %v139 = vmul.f32 %v138, 1.442695
  %v140 = vpow.pop %v139
  %v141 = vmul.f32 %v140, %v140
  %v142 = vsub.f32 1.0, %v141
  %v143 = vrsqrt.pop %v142
  %v144 = vmul.f32 %v142, %v143
  %vm145 = vcmp.eq.f32.partialorder %v142, inf
  %v146 = vsel %vm145, %v142, %v144
  %vm147 = vcmp.eq.f32.partialorder %v142, 0.0
  %v148 = vand.u32 %v142, 2147483648
  %v149 = vsel %vm147, %v148, %v146
  %v152 = vunpack.c.l.s4 1966171168
  %v153 = vunpack.c.0.s8 %v152
  %v154 = vlaneseq
  %v155 = vshrl.u32 %v154, 7
  %v156 = vsub.s32 %v153, %v155
  %v157 = vrot.slane %v140, %v156
  %v158 = vcombine.high %v157, %v157
  %v160 = vunpack.c.l.s4 1966171168
  %v161 = vunpack.c.0.s8 %v160
  %v162 = vlaneseq
  %v163 = vshrl.u32 %v162, 7
  %v164 = vsub.s32 %v161, %v163
  %v165 = vrot.slane %v157, %v164
  %v167 = vunpack.c.l.s4 1966171168
  %v168 = vunpack.c.0.s8 %v167
  %v169 = vlaneseq
  %v170 = vshrl.u32 %v169, 7
  %v171 = vsub.s32 %v168, %v170
  %v172 = vrot.slane %v158, %v171
  %v173 = vlaneseq
  %v174 = vshrl.u32 %v173, 7
  %v175 = vsub.s32 0, %v174
  %v176 = vrot.slane %v165, %v175
  %v177 = vlaneseq
  %v178 = vshrl.u32 %v177, 7
  %v179 = vsub.s32 0, %v178
  %v180 = vrot.slane %v172, %v179
  %181 = vset.pattern.permute.xlu0 0
  %182 = vperm.xlu0 %181, %v176
  %v183 = vpop.permute.xlu0 %182
  %185 = vset.pattern.permute.xlu0 0
  %186 = vperm.xlu0 %185, %v180
  %v187 = vpop.permute.xlu0 %186
  %v189 = vmul.f32 %v183, %v38
  %v190 = vmul.f32 %v187, %v39
  %v193 = vunpack.c.l.s4 1966171168
  %v194 = vunpack.c.0.s8 %v193
  %v195 = vlaneseq
  %v196 = vshrl.u32 %v195, 7
  %v197 = vsub.s32 %v194, %v196
  %v198 = vrot.slane %v149, %v197
  %v199 = vcombine.high %v198, %v198
  %v201 = vunpack.c.l.s4 1966171168
  %v202 = vunpack.c.0.s8 %v201
  %v203 = vlaneseq
  %v204 = vshrl.u32 %v203, 7
  %v205 = vsub.s32 %v202, %v204
  %v206 = vrot.slane %v198, %v205
  %v208 = vunpack.c.l.s4 1966171168
  %v209 = vunpack.c.0.s8 %v208
  %v210 = vlaneseq
  %v211 = vshrl.u32 %v210, 7
  %v212 = vsub.s32 %v209, %v211
  %v213 = vrot.slane %v199, %v212
  %v214 = vlaneseq
  %v215 = vshrl.u32 %v214, 7
  %v216 = vsub.s32 0, %v215
  %v217 = vrot.slane %v206, %v216
  %v218 = vlaneseq
  %v219 = vshrl.u32 %v218, 7
  %v220 = vsub.s32 0, %v219
  %v221 = vrot.slane %v213, %v220
  %222 = vset.pattern.permute.xlu0 0
  %223 = vperm.xlu0 %222, %v217
  %v224 = vpop.permute.xlu0 %223
  %226 = vset.pattern.permute.xlu0 0
  %227 = vperm.xlu0 %226, %v221
  %v228 = vpop.permute.xlu0 %227
  %v230 = vmul.f32 %v224, %v40
  %v231 = vmul.f32 %v228, %v41
  %v232 = vadd.f32 %v189, %v230
  %v233 = vadd.f32 %v190, %v231
  %v236 = vunpack.c.l.s4 1966171168
  %v237 = vunpack.c.0.s8 %v236
  %v238 = vlaneseq
  %v239 = vshrl.u32 %v238, 7
  %v240 = vsub.s32 %v237, %v239
  %v241 = vrot.slane %v129, %v240
  %v242 = vcombine.high %v241, %v241
  %v244 = vunpack.c.l.s4 1966171168
  %v245 = vunpack.c.0.s8 %v244
  %v246 = vlaneseq
  %v247 = vshrl.u32 %v246, 7
  %v248 = vsub.s32 %v245, %v247
  %v249 = vrot.slane %v241, %v248
  %v251 = vunpack.c.l.s4 1966171168
  %v252 = vunpack.c.0.s8 %v251
  %v253 = vlaneseq
  %v254 = vshrl.u32 %v253, 7
  %v255 = vsub.s32 %v252, %v254
  %v256 = vrot.slane %v242, %v255
  %v257 = vlaneseq
  %v258 = vshrl.u32 %v257, 7
  %v259 = vsub.s32 0, %v258
  %v260 = vrot.slane %v249, %v259
  %v261 = vlaneseq
  %v262 = vshrl.u32 %v261, 7
  %v263 = vsub.s32 0, %v262
  %v264 = vrot.slane %v256, %v263
  %v267 = vadd.f32 %v232, %v260
  %v268 = vadd.f32 %v233, %v264
  %v269 = vld [vmem:[%s9] sm:$0xff]
  %v270 = vld [vmem:[%s9 + $0x8] sm:$0xff]
  %v271 = vld [vmem:[%s9 + $0x10] sm:$0xff]
  %v272 = vld [vmem:[%s9 + $0x18] sm:$0xff]
  %v273 = vld [vmem:[%s10] sm:$0x1]
  %v275 = vlaneseq
  %v276 = vshrl.u32 %v275, 7
  %v277 = vsub.s32 0, %v276
  %v278 = vrot.slane %v273, %v277
  %vm280 = vcmask 261120
  %v282 = vsel %vm280, %v267, 0
  %v285 = vsel %vm280, %v268, 0
  %287 = vmatprep.subr.mxu0 0.0
  %288 = vmatpush1.msra.mxu0 0.0
  %289 = vmatprep.subr.mxu0 0.0
  %290 = vmatpush1.msra.mxu0 0.0
  %291 = vmatprep.subr.mxu0 0.0
  %292 = vmatpush1.msra.mxu0 0.0
  %293 = vmatprep.subr.mxu0 0.0
  %294 = vmatpush1.msra.mxu0 0.0
  %295 = vmatprep.subr.mxu0 0.0
  %296 = vmatpush1.msra.mxu0 0.0
  %297 = vmatprep.subr.mxu0 0.0
  %298 = vmatpush1.msra.mxu0 0.0
  %299 = vmatprep.subr.mxu0 0.0
  %300 = vmatpush1.msra.mxu0 0.0
  %301 = vmatprep.subr.mxu0 0.0
  %302 = vmatpush1.msra.mxu0 0.0
  %303 = vmatprep.subr.mxu0 0.0
  %304 = vmatpush1.msra.mxu0 0.0
  %305 = vmatprep.subr.mxu0 0.0
  %306 = vmatpush1.msra.mxu0 0.0
  %307 = vmatprep.subr.mxu0 0.0
  %308 = vmatpush1.msra.mxu0 0.0
  %309 = vmatprep.subr.mxu0 0.0
  %310 = vmatpush1.msra.mxu0 0.0
  %311 = vmatprep.subr.mxu0 0.0
  %312 = vmatpush1.msra.mxu0 %v272
  %313 = vmatprep.subr.mxu0 0.0
  %314 = vmatpush1.msra.mxu0 %v271
  %315 = vmatprep.subr.mxu0 0.0
  %316 = vmatpush1.msra.mxu0 %v270
  %317 = vmatprep.subr.mxu0 0.0
  %318 = vmatpush1.msra.mxu0 %v269
  %319 = vmatprep.subr.mxu0 0.0
  %320 = vmatpush2.msra.mxu0 0.0
  %321 = vmatprep.subr.mxu0 0.0
  %322 = vmatpush2.msra.mxu0 0.0
  %323 = vmatprep.subr.mxu0 0.0
  %324 = vmatpush2.msra.mxu0 0.0
  %325 = vmatprep.subr.mxu0 0.0
  %326 = vmatpush2.msra.mxu0 0.0
  %327 = vmatprep.subr.mxu0 0.0
  %328 = vmatpush2.msra.mxu0 0.0
  %329 = vmatprep.subr.mxu0 0.0
  %330 = vmatpush2.msra.mxu0 0.0
  %331 = vmatprep.subr.mxu0 0.0
  %332 = vmatpush2.msra.mxu0 0.0
  %333 = vmatprep.subr.mxu0 0.0
  %334 = vmatpush2.msra.mxu0 0.0
  %335 = vmatprep.subr.mxu0 0.0
  %336 = vmatpush2.msra.mxu0 0.0
  %337 = vmatprep.subr.mxu0 0.0
  %338 = vmatpush2.msra.mxu0 0.0
  %339 = vmatprep.subr.mxu0 0.0
  %340 = vmatpush2.msra.mxu0 0.0
  %341 = vmatprep.subr.mxu0 0.0
  %342 = vmatpush2.msra.mxu0 0.0
  %343 = vmatprep.subr.mxu0 0.0
  %344 = vmatpush2.msra.mxu0 0.0
  %345 = vmatprep.subr.mxu0 0.0
  %346 = vmatpush2.msra.mxu0 0.0
  %347 = vmatprep.subr.mxu0 0.0
  %348 = vmatpush2.msra.mxu0 0.0
  %349 = vmatprep.subr.mxu0 0.0
  %350 = vmatpush2.msra.mxu0 0.0
  %351 = vmatprep.mubr.f32.mxu0 0.0
  %352 = vmatmul.mubr.f32.gmra.mxu0 %v282
  %v353 = vpop.f32.mrf.mxu0
  %v354 = vadd.f32 %v278, %v353
  %v355 = vpop.f32.mrf.mxu0
  %356 = vmatprep.mubr.f32.mxu0 0.0
  %357 = vmatmul.mubr.f32.gmra.mxu0 %v285
  %v358 = vpop.f32.mrf.mxu0
  %v359 = vadd.f32 %v278, %v358
  %v360 = vpop.f32.mrf.mxu0
  %361 = vdwg.mxu0
  %v362 = vsub.f32 %v40, %v354
  %v363 = vsub.f32 %v41, %v359
  %v364 = vmul.f32 %v362, %v362
  %v365 = vmul.f32 %v363, %v363
  %v366 = vsel %vm280, %v364, 0.0
  %367 = vadd.xlane.f32.xlu0 %v366
  %v368 = vpop.xlane.xlu0 %367
  %v369 = vsel %vm280, %v365, 0.0
  %370 = vadd.xlane.f32.xlu0 %v369
  %v371 = vpop.xlane.xlu0 %370
  %vm372 = vcmask 7168
  %v373 = vsel %vm372, %v42, 0.0
  %v374 = vsel %vm372, %v43, 0.0
  %v375 = vadd.f32 %v373, %v374
  %376 = vadd.xlane.f32.xlu0 %v375
  %v377 = vpop.xlane.xlu0 %376
  %v378 = vrot.slane %v377, 4
  %v379 = vadd.f32 %v377, %v378
  %v380 = vrot.slane %v379, 2
  %v381 = vadd.f32 %v379, %v380
  %v382 = vrot.slane %v381, 1
  %v383 = vadd.f32 %v381, %v382
  %s384 = vtos %v383
  %s385 = smax.f32 %s384, 1.0
  %v386 = vstv %s385
  %v387 = vrcp.pop %v386
  %s388 = vtos %v387
  %v389 = vsel %vm372, %v368, 0.0
  %v390 = vsel %vm372, %v371, 0.0
  %v391 = vadd.f32 %v389, %v390
  %392 = vadd.xlane.f32.xlu0 %v391
  %v393 = vpop.xlane.xlu0 %392
  %v394 = vrot.slane %v393, 4
  %v395 = vadd.f32 %v393, %v394
  %v396 = vrot.slane %v395, 2
  %v397 = vadd.f32 %v395, %v396
  %v398 = vrot.slane %v397, 1
  %v399 = vadd.f32 %v397, %v398
  %s400 = vtos %v399
  %s401 = smul.f32 %s400, 0.001953125
  %v402 = vmul.f32 %v368, %v42
  %v403 = vmul.f32 %v371, %v43
  %v404 = vsel %vm372, %v402, 0.0
  %v405 = vsel %vm372, %v403, 0.0
  %v406 = vadd.f32 %v404, %v405
  %407 = vadd.xlane.f32.xlu0 %v406
  %v408 = vpop.xlane.xlu0 %407
  %v409 = vrot.slane %v408, 4
  %v410 = vadd.f32 %v408, %v409
  %v411 = vrot.slane %v410, 2
  %v412 = vadd.f32 %v410, %v411
  %v413 = vrot.slane %v412, 1
  %v414 = vadd.f32 %v412, %v413
  %s415 = vtos %v414
  %s416 = smul.f32 %s415, %s388
  %s417 = sadd.f32 %s401, %s416
  %vm418 = vcmask 195584
  %v419 = vsel %vm418, %v44, -inf
  %420 = vmax.xlane.f32.xlu0 %v419
  %v421 = vpop.xlane.xlu0 %420
  %v422 = vsel %vm418, %v45, -inf
  %423 = vmax.xlane.f32.xlu0 %v422
  %v424 = vpop.xlane.xlu0 %423
  %v425 = vsub.f32 %v44, %v421
  %v426 = vsub.f32 %v45, %v424
  %v427 = vmul.f32 %v425, 1.442695
  %v428 = vpow.pop %v427
  %v429 = vmul.f32 %v426, 1.442695
  %v430 = vpow.pop %v429
  %v431 = vsel %vm418, %v428, 0.0
  %432 = vadd.xlane.f32.xlu0 %v431
  %v433 = vpop.xlane.xlu0 %432
  %v434 = vsel %vm418, %v430, 0.0
  %435 = vadd.xlane.f32.xlu0 %v434
  %v436 = vpop.xlane.xlu0 %435
  %v437 = vlog2.pop %v433
  %v438 = vmul.f32 %v437, 0.6931472
  %v439 = vlog2.pop %v436
  %v440 = vmul.f32 %v439, 0.6931472
  %v441 = vadd.f32 %v421, %v438
  %v442 = vadd.f32 %v424, %v440
  %v443 = vsub.f32 %v441, %v46
  %v444 = vsub.f32 %v442, %v47
  %v445 = vsel %vm372, %v443, 0.0
  %v446 = vsel %vm372, %v444, 0.0
  %v447 = vadd.f32 %v445, %v446
  %448 = vadd.xlane.f32.xlu0 %v447
  %v449 = vpop.xlane.xlu0 %448
  %v450 = vrot.slane %v449, 4
  %v451 = vadd.f32 %v449, %v450
  %v452 = vrot.slane %v451, 2
  %v453 = vadd.f32 %v451, %v452
  %v454 = vrot.slane %v453, 1
  %v455 = vadd.f32 %v453, %v454
  %s456 = vtos %v455
  %s457 = smul.f32 %s456, 0.0625
  %v458 = vmul.f32 %v443, %v42
  %v459 = vmul.f32 %v444, %v43
  %v460 = vsel %vm372, %v458, 0.0
  %v461 = vsel %vm372, %v459, 0.0
  %v462 = vadd.f32 %v460, %v461
  %463 = vadd.xlane.f32.xlu0 %v462
  %v464 = vpop.xlane.xlu0 %463
  %v465 = vrot.slane %v464, 4
  %v466 = vadd.f32 %v464, %v465
  %v467 = vrot.slane %v466, 2
  %v468 = vadd.f32 %v466, %v467
  %v469 = vrot.slane %v468, 1
  %v470 = vadd.f32 %v468, %v469
  %s471 = vtos %v470
  %s472 = smul.f32 %s471, %s388
  %s473 = sadd.f32 %s457, %s472
  %v474 = vlaneseq
  %v475 = vand.u32 %v474, 127
  %vm476 = vcmp.eq.s32.totalorder %v475, 0
  %vm477 = vcmp.eq.s32.totalorder %v475, 1
  %v478 = vstv %s473
  %v479 = vsel %vm477, %v478, 0.0
  %v480 = vstv %s417
  %v481 = vsel %vm476, %v480, %v479
  %482 = vst [vmem:[%s11] sm:$0x1] %v481
  // Predicated region
  $region46: #{gaussian_sde_decoder_forward.1} parent=0 // pred_check
    _
  $region47: #{gaussian_sde_decoder_forward.1} parent=0 // pred_check_branch
    %484 = sbr.rel (0) target = $region49
  $region48: #{gaussian_sde_decoder_forward.1} parent=0 // pred_region
    _
  $region49: #{gaussian_sde_decoder_forward.1} parent=0 // pred_fallthru
    _
  // Predicated region
  $region50: #{gaussian_sde_decoder_forward.1} parent=0 // pred_check
    _
  $region51: #{gaussian_sde_decoder_forward.1} parent=0 // pred_check_branch
    %486 = sbr.rel (0) target = $region53
  $region52: #{gaussian_sde_decoder_forward.1} parent=0 // pred_region
    _
  $region53: #{gaussian_sde_decoder_forward.1} parent=0 // pred_fallthru
    _

</llo_original>
